<compile_context>
chip_gen: v7x
topology: tpu7x:2x2x1
jax: 0.10.0
libtpu: 0.0.40
codegen_flags: <defaults>
</compile_context>

<pallas_src>
import math

import jax
import jax.numpy as jnp
from jax.experimental import pallas as pl
from jax.experimental.pallas import tpu as pltpu


def layerscale_kernel(x_ref, g_ref, o_ref):
    # (tm, tl) tile * (1, tl) resident gamma row -> broadcast VPU multiply.
    # The multiply runs in the promoted dtype (g_ref may be wider than x_ref),
    # then the product is cast to the output dtype.
    o_ref[...] = (x_ref[...] * g_ref[...]).astype(o_ref.dtype)


def _round_down(v, m):
    return (v // m) * m


def _round_up(v, m):
    return -(-v // m) * m


def layer_scale(x: jax.Array, gamma: jax.Array, *, donate: bool = False) -> jax.Array:
    """LayerScale forward: x * gamma (gamma broadcast over the last dim).

    x: (..., D); gamma: (D,). Returns an array with x's shape and dtype.
    donate=True mirrors PyTorch inplace=True: the output aliases x's buffer
    when the caller donates x (no extra HBM allocation / copy on donation).
    """
    orig_shape = x.shape
    D = orig_shape[-1]
    assert gamma.shape == (D,), f"gamma must be ({D},), got {gamma.shape}"

    total = x.size
    itemsize = jnp.dtype(x.dtype).itemsize
    # Multiply in the promoted dtype (so an f32 gamma with bf16 x is not
    # pre-rounded to bf16), but keep the output in x.dtype.
    compute_dtype = jnp.promote_types(x.dtype, gamma.dtype)
    if compute_dtype == jnp.float64:          # no f64 on the TPU vector units
        compute_dtype = jnp.float32
    g_itemsize = jnp.dtype(compute_dtype).itemsize

    # --- Lane-dense repacking ----------------------------------------------
    lane_l = (D * 128) // math.gcd(D, 128)    # lcm(D, 128)
    if total % lane_l == 0:
        L = lane_l
        g_row = jnp.tile(gamma.astype(compute_dtype), L // D).reshape(1, L)
    else:
        # TODO(synk): ragged case keeps the native width -> masked (partial
        # lane) stores when D % 128 != 0. A lane-dense repack here would need
        # a pad + slice pass whose extra HBM traffic costs more than the
        # masking it removes, so the degradation is documented instead.
        L = D
        g_row = gamma.astype(compute_dtype).reshape(1, D)
    R = total // L
    x2 = x.reshape(R, L)

    # --- Generation-aware tile sizing ----------------------------------------
    try:
        phys_vmem = int(getattr(pltpu.get_tpu_info(), "vmem_capacity_bytes",
                                64 << 20))
    except Exception:  # e.g. interpret mode off-TPU
        phys_vmem = 64 << 20
    # Budget for the 4 live data tiles (x + out, each double-buffered):
    # 24 MiB on v5e/v6e (128 MiB physical VMEM), ~21 MiB on v7x (64 MiB).
    pipeline_budget = min(24 << 20, phys_vmem // 3)
    tile_target = max(512 << 10, pipeline_budget // 4)   # bytes per (tm, tl) tile

    sublane = {4: 8, 2: 16, 1: 32}.get(itemsize, 8)

    # Column tiling only kicks in for absurdly wide rows (one sublane-group of
    # rows would already blow the tile budget); otherwise keep full-width rows.
    if sublane * L * itemsize > tile_target:
        tl = max(128, _round_down(tile_target // (sublane * itemsize), 128))
        tl = min(tl, _round_up(L, 128))
    else:
        tl = L
    bytes_per_tile_row = tl * itemsize

    # Row-tile size from the byte budget (amortizes ~0.35 us/step overhead).
    tm = max(sublane, _round_down(tile_target // bytes_per_tile_row, sublane))
    # Keep >= 2 (ideally >= 4) row steps when R allows: restores in/out DMA
    # overlap on every gen and lets v7x's two TensorCores split the grid.
    if R >= 4 * sublane:
        tm = min(tm, max(sublane, _round_down(R // 4, sublane)))
    elif R >= 2 * sublane:
        tm = min(tm, max(sublane, _round_down(R // 2, sublane)))
    tm = min(tm, _round_up(R, sublane))       # never much taller than the data
    if R < sublane:
        tm = R                                # tiny input: full-extent block

    grid_rows = pl.cdiv(R, tm)
    grid_cols = pl.cdiv(L, tl)

    # Scoped-VMEM limit derived from the actual (layout-padded) footprint so
    # the big tiles compile everywhere (v5e's 16 MiB default is too small)
    # without overshooting v7x's 64 MiB physical VMEM.
    padded_tile = _round_up(tm, sublane) * _round_up(tl, 128) * itemsize
    padded_gamma = 8 * _round_up(tl, 128) * g_itemsize
    footprint = 4 * padded_tile + 2 * padded_gamma + (4 << 20)   # + headroom
    vmem_limit = int(min(phys_vmem * 5 // 8, max(footprint, 24 << 20)))

    cost = pl.CostEstimate(
        flops=total,
        transcendentals=0,
        bytes_accessed=2 * total * itemsize + L * g_itemsize,
    )

    out2 = pl.pallas_call(
        layerscale_kernel,
        out_shape=jax.ShapeDtypeStruct((R, L), x.dtype),
        grid_spec=pltpu.PrefetchScalarGridSpec(
            num_scalar_prefetch=0,
            grid=(grid_rows, grid_cols),
            in_specs=[
                pl.BlockSpec((tm, tl), lambda i, j: (i, j)),
                # Constant row index -> gamma stays VMEM-resident across rows.
                pl.BlockSpec((1, tl), lambda i, j: (0, j)),
            ],
            out_specs=pl.BlockSpec((tm, tl), lambda i, j: (i, j)),
        ),
        compiler_params=pltpu.CompilerParams(
            dimension_semantics=("parallel", "parallel"),
            vmem_limit_bytes=vmem_limit,
        ),
        cost_estimate=cost,
        # Mirrors PyTorch inplace=True: output aliases x's buffer on donation.
        input_output_aliases=({0: 0} if donate else {}),
    )(x2, g_row)

    return out2.reshape(orig_shape)


if __name__ == "__main__":
    init_values = 1e-5
    key = jax.random.PRNGKey(0)

    # 1) Small ViT-like shape (batch, tokens, dim) — lane-dense fast path.
    B, N, D = 2, 8, 32
    x = jax.random.normal(key, (B, N, D), dtype=jnp.float32)
    gamma = init_values * jnp.ones((D,), dtype=jnp.float32)   # nn.Parameter init
    out = jax.block_until_ready(layer_scale(x, gamma))
    assert out.shape == x.shape and out.dtype == x.dtype
    assert jnp.allclose(out, x * gamma, atol=1e-7, rtol=1e-6), "mismatch (basic)"

    # 2) Larger shape exercising a multi-step parallel row grid (4 steps).
    B2, N2, D2 = 8, 256, 192
    x2 = jax.random.normal(jax.random.PRNGKey(1), (B2, N2, D2), dtype=jnp.float32)
    gamma2 = init_values * jnp.ones((D2,), dtype=jnp.float32)
    out2 = jax.block_until_ready(layer_scale(x2, gamma2))
    assert jnp.allclose(out2, x2 * gamma2, atol=1e-7, rtol=1e-6), "mismatch (tiled grid)"

    # 3) bf16 activations with an f32 gamma parameter (promoted-dtype multiply).
    B3, N3, D3 = 2, 16, 64
    x3 = jax.random.normal(jax.random.PRNGKey(2), (B3, N3, D3), dtype=jnp.bfloat16)
    gamma3 = init_values * jnp.ones((D3,), dtype=jnp.float32)
    out3 = jax.block_until_ready(layer_scale(x3, gamma3))
    ref3 = (x3.astype(jnp.float32) * gamma3).astype(jnp.bfloat16)
    assert out3.dtype == x3.dtype
    assert jnp.allclose(out3.astype(jnp.float32), ref3.astype(jnp.float32)), "mismatch (bf16)"

    # 4) Ragged fallback path (element count not a multiple of lcm(D, 128)).
    B4, N4, D4 = 2, 7, 32
    x4 = jax.random.normal(jax.random.PRNGKey(3), (B4, N4, D4), dtype=jnp.float32)
    gamma4 = init_values * jnp.ones((D4,), dtype=jnp.float32)
    out4 = jax.block_until_ready(layer_scale(x4, gamma4))
    assert jnp.allclose(out4, x4 * gamma4, atol=1e-7, rtol=1e-6), "mismatch (fallback)"

    print("KERNEL_OK")
</pallas_src>

<mosaic_0001>
module attributes {stable_mosaic.version = 11 : i64} {
  func.func @layerscale_kernel(%arg0: i32, %arg1: i32, %arg2: memref<4x128xf32, #tpu.memory_space<vmem>>, %arg3: memref<1x128xf32, #tpu.memory_space<vmem>>, %arg4: memref<4x128xf32, #tpu.memory_space<vmem>>) attributes {dimension_semantics = [#tpu.dimension_semantics<parallel>, #tpu.dimension_semantics<parallel>], iteration_bounds = array<i64: 1, 1>, scalar_prefetch = 0 : i64, scratch_operands = 0 : i64, tpu.core_type = #tpu.core_type<tc>, window_params = [{transform_indices = @transform_0, window_bounds = array<i64: 4, 128>}, {transform_indices = @transform_1, window_bounds = array<i64: 1, 128>}, {transform_indices = @transform_2, window_bounds = array<i64: 4, 128>}]} {
    %c0 = arith.constant 0 : index
    %c0_0 = arith.constant 0 : index
    %0 = vector.load %arg2[%c0, %c0_0] : memref<4x128xf32, #tpu.memory_space<vmem>>, vector<4x128xf32>
    %c0_1 = arith.constant 0 : index
    %c0_2 = arith.constant 0 : index
    %1 = vector.load %arg3[%c0_1, %c0_2] : memref<1x128xf32, #tpu.memory_space<vmem>>, vector<1x128xf32>
    %2 = vector.broadcast %1 : vector<1x128xf32> to vector<4x128xf32>
    %3 = arith.mulf %0, %2 : vector<4x128xf32>
    %c0_3 = arith.constant 0 : index
    %c0_4 = arith.constant 0 : index
    %4 = vector.load %arg4[%c0_3, %c0_4] : memref<4x128xf32, #tpu.memory_space<vmem>>, vector<4x128xf32>
    tpu.vector_store %arg4[%c0_3, %c0_4], %3 {strides = array<i32>} : memref<4x128xf32, #tpu.memory_space<vmem>>, vector<4x128xf32>,
    return
  }
  func.func @transform_0(%arg0: i32, %arg1: i32) -> (i32, i32) {
    %c0_i32 = arith.constant 0 : i32
    return %arg0, %arg1 : i32, i32
  }
  func.func @transform_1(%arg0: i32, %arg1: i32) -> (i32, i32) {
    %c0_i32 = arith.constant 0 : i32
    %c0_i32_0 = arith.constant 0 : i32
    return %c0_i32, %arg1 : i32, i32
  }
  func.func @transform_2(%arg0: i32, %arg1: i32) -> (i32, i32) {
    %c0_i32 = arith.constant 0 : i32
    return %arg0, %arg1 : i32, i32
  }
}

</mosaic_0001>

<llo_original>
// kernel: tpu_custom_call.1
$region0: #{tpu_custom_call.1}
  #allocation0 [shape = 'u32[]', space=smem, size = 0x4, offset = 0x4, fixed_abs, tag = 'smem constant byte address 0x4 - core index']
  #allocation1 [shape = 'u32[144,128]{1,0:T(1,128)}', space=vmem, size = 0x12000, scoped, tag = 'internal scratch']
  %s0 = inlined_call_operand.hbm [shape: f32[4,128], index: 0, kind: input, shape index: {}]
  %s1 = inlined_call_operand.vmem [shape: f32[1,128], index: 1, kind: input, shape index: {}]
  %s2 = inlined_call_operand.hbm [shape: f32[4,128], index: 2, kind: output, shape index: {}]
  %s3 = sld [smem:[#allocation0]]
  $region22: #{tpu_custom_call.1} parent=0
    _
  %s5 = ssub.s32 1, %s3
  %s6 = scalar_select 0, %s5, %s3
  $region1: #{tpu_custom_call.1} parent=0
    #allocation2 [shape = 'u8[2048]{0}', space=vmem, size = 0x800, scoped, tag = 'input window, operand 0, single buffered']
    #allocation3 [shape = 's32[1]{0}', space=sflag, size = 0x4, scoped, tag = 'scoped memory for tpu_custom_call.1']
    #allocation4 [shape = 's32[1]{0}', space=sflag, size = 0x4, scoped, tag = 'scoped memory for tpu_custom_call.1']
    #allocation5 [shape = 'u8[2048]{0}', space=vmem, size = 0x800, scoped, tag = 'output window, operand 0, single buffered']
    %7 = vsyncpa [#allocation3], 0
    %8 = vsyncpa [#allocation4], 0
    // Predicated region
    $region2: #{tpu_custom_call.1} parent=1 // pred_check
      _
    $region3: #{tpu_custom_call.1} parent=1 // pred_check_branch
      %10 = sbr.rel (0) target = $region5
    $region4: #{tpu_custom_call.1} parent=1 // pred_region
      %s12 = ssub.s32 64, 64
      %13 = vsyncadd [#allocation3], %s12
      %s15 = sshll.u32 [#allocation2], 4
      %s16 = int_to_ptr.vmem [resolvable:$true] %s15
      %18 = dma.hbm_to_vmem [thread:$0]  %s0, 64, %s16, [#allocation3]
    $region5: #{tpu_custom_call.1} parent=1 // pred_fallthru
      _
    // Predicated region
    $region6: #{tpu_custom_call.1} parent=1 // pred_check
      _
    $region7: #{tpu_custom_call.1} parent=1 // pred_check_branch
      %20 = sbr.rel (0) target = $region9
    $region8: #{tpu_custom_call.1} parent=1 // pred_region
      _
    $region9: #{tpu_custom_call.1} parent=1 // pred_fallthru
      _
    // Predicated region
    $region10: #{tpu_custom_call.1} parent=1 // pred_check
      _
    $region11: #{tpu_custom_call.1} parent=1 // pred_check_branch
      %22 = sbr.rel (0) target = $region13
    $region12: #{tpu_custom_call.1} parent=1 // pred_region
      %23 = dma.done [#allocation3], 64
    $region13: #{tpu_custom_call.1} parent=1 // pred_fallthru
      _
    %v24 = vld [vmem:[#allocation2] sm:$0xf]
    %v25 = vld [vmem:[%s1] sm:$0x1]
    %v27 = vlaneseq
    %v28 = vshrl.u32 %v27, 7
    %v29 = vsub.s32 0, %v28
    %v30 = vrot.slane %v25, %v29
    %v32 = vmul.f32 %v24, %v30
    %33 = vst [vmem:[#allocation5] sm:$0xf] %v32
    // Predicated region
    $region14: #{tpu_custom_call.1} parent=1 // pred_check
      _
    $region15: #{tpu_custom_call.1} parent=1 // pred_check_branch
      %35 = sbr.rel (0) target = $region17
    $region16: #{tpu_custom_call.1} parent=1 // pred_region
      %s37 = ssub.s32 64, 64
      %38 = vsyncadd [#allocation4], %s37
      %s40 = sshll.u32 [#allocation5], 4
      %s41 = int_to_ptr.vmem [resolvable:$true] %s40
      %43 = dma.vmem_to_hbm [thread:$0]  %s41, 64, %s2, [#allocation4]
    $region17: #{tpu_custom_call.1} parent=1 // pred_fallthru
      _
    // Predicated region
    $region18: #{tpu_custom_call.1} parent=1 // pred_check
      _
    $region19: #{tpu_custom_call.1} parent=1 // pred_check_branch
      %45 = sbr.rel (0) target = $region21
    $region20: #{tpu_custom_call.1} parent=1 // pred_region
      %46 = dma.done [#allocation4], 64
    $region21: #{tpu_custom_call.1} parent=1 // pred_fallthru
      _
    %47 = vsyncpa [#allocation3], 1
    %48 = vsyncpa [#allocation4], 1

</llo_original>
